<compile_context>
chip_gen: v7x
topology: tpu7x:2x2x1
jax: 0.10.0
libtpu: 0.0.40
codegen_flags: <defaults>
</compile_context>

<pallas_src>
import jax
import jax.numpy as jnp
from jax.experimental import pallas as pl
from jax.experimental.pallas import tpu as pltpu

_MIB = 1024 * 1024


def _normalization_kernel(scale_ref, bias_ref, img_ref, out_ref):
    # scale_ref / bias_ref : VMEM (TR, 1) f32; scale = 1/std, bias = -mean/std
    # img_ref / out_ref    : VMEM (TR, TK) tile of the flattened (N*C, H*W) image
    x = img_ref[...].astype(jnp.float32)
    y = x * scale_ref[...] + bias_ref[...]          # (TR,1) broadcasts over lanes
    out_ref[...] = y.astype(out_ref.dtype)


def _tpu_config():
    """Generation-aware (target_block_bytes, vmem_limit_bytes, min_grid_blocks)."""
    try:
        kind = jax.devices()[0].device_kind.lower()
    except Exception:
        kind = ""
    if "v7" in kind:
        # 3.2 TB/s HBM -> bigger tiles to amortize the ~0.35us/step overhead,
        # but only 64 MiB VMEM and 2 TCs -> modest vmem limit, >=4 grid blocks.
        return 6 * _MIB, 40 * _MIB, 4
    if "v6" in kind:
        return 4 * _MIB, 48 * _MIB, 1
    # v5e / unknown: ~0.8 TB/s HBM is already saturated around 2 MiB tiles.
    return 2 * _MIB, 32 * _MIB, 1


def _round_down(x, m):
    return (x // m) * m


def _pick_tiles(R, K, elem_bytes, sublane, target_block_bytes, min_grid_blocks):
    """Pick a lane-dense (TR, TK) tile obeying the (8, 128) layout rule."""
    # Column tile: multiple of 128 (Pallas masks the ragged tail block), or the
    # full extent when the whole lane axis fits in <= 128 lanes.
    if K <= 128 or K % 128 == 0:
        k_full, k_step = K, min(K, 128)
    else:
        k_full, k_step = _round_down(K, 128), 128

    # Row tile: multiple of the dtype's sublane packing factor, or full extent.
    if R <= sublane:
        tr, r_min = R, R
    else:
        rows_fit = max(1, target_block_bytes // max(k_full * elem_bytes, 1))
        tr = max(sublane, _round_down(min(R, rows_fit), sublane))
        r_min = sublane

    cols_fit = max(k_step,
                   _round_down(target_block_bytes // max(tr * elem_bytes, 1), k_step))
    tk = min(k_full, cols_fit)

    # Keep enough blocks for multi-TensorCore sharding (v7x has 2 TCs/chip):
    # shrink the tile rather than collapsing the grid to a single mega-block.
    def n_blocks(tr_, tk_):
        return pl.cdiv(R, tr_) * pl.cdiv(K, tk_)

    while n_blocks(tr, tk) < min_grid_blocks:
        if tk > k_step:
            tk = max(k_step, _round_down(tk // 2, k_step))
        elif tr > r_min:
            tr = max(r_min, _round_down(tr // 2, sublane))
        else:
            break
    return tr, tk


def normalization(img, mean, std, *, donate_input=False):
    """(img - mean[:,None,None]) / std[:,None,None] for an NCHW image."""
    N, C, H, W = img.shape
    mean = mean.astype(jnp.float32).reshape(-1)
    std = std.astype(jnp.float32).reshape(-1)

    # Match the PyTorch module's float output even for integer (e.g. uint8) images.
    out_dtype = img.dtype if jnp.issubdtype(img.dtype, jnp.floating) else jnp.float32

    # Fold the divide into per-channel scale/bias (no per-element EUP divide).
    scale_c = 1.0 / std                     # (C,)
    bias_c = -mean / std                    # (C,)

    R, K = N * C, H * W
    # Row r of the flattened image corresponds to channel r % C.
    scale_rows = jnp.tile(scale_c, N).reshape(R, 1)
    bias_rows = jnp.tile(bias_c, N).reshape(R, 1)
    img2 = img.reshape(R, K)

    target_block_bytes, vmem_limit, min_grid_blocks = _tpu_config()
    in_bytes = jnp.dtype(img.dtype).itemsize
    out_bytes = jnp.dtype(out_dtype).itemsize
    elem_bytes = max(in_bytes, out_bytes)            # budget on the fatter stream
    sublane = 8 * max(1, 4 // in_bytes)              # 8 f32, 16 bf16, 32 int8/fp8

    TR, TK = _pick_tiles(R, K, elem_bytes, sublane, target_block_bytes, min_grid_blocks)
    grid = (pl.cdiv(R, TR), pl.cdiv(K, TK))

    # Live VMEM = double-buffered img in + out tiles + tiny scale/bias buffers.
    live_vmem = 2 * TR * TK * (in_bytes + out_bytes) + 4 * TR * 128 * 4
    vmem_limit = max(vmem_limit, live_vmem + 2 * _MIB)

    grid_spec = pltpu.PrefetchScalarGridSpec(
        num_scalar_prefetch=0,
        grid=grid,
        in_specs=[
            pl.BlockSpec((TR, 1), lambda i, j: (i, 0)),   # per-row scale (no re-DMA over j)
            pl.BlockSpec((TR, 1), lambda i, j: (i, 0)),   # per-row bias
            pl.BlockSpec((TR, TK), lambda i, j: (i, j)),  # image tile
        ],
        out_specs=pl.BlockSpec((TR, TK), lambda i, j: (i, j)),
    )

    # Only alias when the caller donates and dtypes match (avoids a second
    # full-size image buffer on memory-tight hosts).
    io_aliases = {2: 0} if (donate_input and img.dtype == out_dtype) else {}

    out2 = pl.pallas_call(
        _normalization_kernel,
        out_shape=jax.ShapeDtypeStruct((R, K), out_dtype),
        grid_spec=grid_spec,
        compiler_params=pltpu.CompilerParams(
            dimension_semantics=("parallel", "parallel"),
            vmem_limit_bytes=int(vmem_limit),
        ),
        input_output_aliases=io_aliases,
    )(scale_rows, bias_rows, img2)

    return out2.reshape(N, C, H, W)


if __name__ == "__main__":
    # Deterministic "VGG19" normalization statistics (per __init__ shapes: (C,)).
    mean = jnp.array([0.485, 0.456, 0.406], dtype=jnp.float32)
    std = jnp.array([0.229, 0.224, 0.225], dtype=jnp.float32)

    key = jax.random.PRNGKey(0)
    img = jax.random.uniform(key, (2, 3, 16, 16), dtype=jnp.float32)

    out = normalization(img, mean, std)
    out = jax.block_until_ready(out)

    # Reference check in plain JAX.
    ref = (img - mean.reshape(-1, 1, 1)) / std.reshape(-1, 1, 1)
    assert out.shape == img.shape
    assert out.dtype == ref.dtype
    assert jnp.allclose(out, ref, atol=1e-5, rtol=1e-5)

    print("KERNEL_OK")
</pallas_src>

<mosaic_0001>
module attributes {stable_mosaic.version = 11 : i64} {
  func.func @_normalization_kernel(%arg0: i32, %arg1: i32, %arg2: memref<6x1xf32, #tpu.memory_space<vmem>>, %arg3: memref<6x1xf32, #tpu.memory_space<vmem>>, %arg4: memref<6x256xf32, #tpu.memory_space<vmem>>, %arg5: memref<6x256xf32, #tpu.memory_space<vmem>>) attributes {dimension_semantics = [#tpu.dimension_semantics<parallel>, #tpu.dimension_semantics<parallel>], iteration_bounds = array<i64: 1, 1>, scalar_prefetch = 0 : i64, scratch_operands = 0 : i64, tpu.core_type = #tpu.core_type<tc>, window_params = [{transform_indices = @transform_0, window_bounds = array<i64: 6, 1>}, {transform_indices = @transform_1, window_bounds = array<i64: 6, 1>}, {transform_indices = @transform_2, window_bounds = array<i64: 6, 256>}, {transform_indices = @transform_3, window_bounds = array<i64: 6, 256>}]} {
    %c0 = arith.constant 0 : index
    %c0_0 = arith.constant 0 : index
    %0 = vector.load %arg4[%c0, %c0_0] : memref<6x256xf32, #tpu.memory_space<vmem>>, vector<6x256xf32>
    %c0_1 = arith.constant 0 : index
    %c0_2 = arith.constant 0 : index
    %1 = vector.load %arg2[%c0_1, %c0_2] : memref<6x1xf32, #tpu.memory_space<vmem>>, vector<6x1xf32>
    %2 = vector.broadcast %1 : vector<6x1xf32> to vector<6x256xf32>
    %3 = arith.mulf %0, %2 : vector<6x256xf32>
    %c0_3 = arith.constant 0 : index
    %c0_4 = arith.constant 0 : index
    %4 = vector.load %arg3[%c0_3, %c0_4] : memref<6x1xf32, #tpu.memory_space<vmem>>, vector<6x1xf32>
    %5 = vector.broadcast %4 : vector<6x1xf32> to vector<6x256xf32>
    %6 = arith.addf %3, %5 : vector<6x256xf32>
    %c0_5 = arith.constant 0 : index
    %c0_6 = arith.constant 0 : index
    %7 = vector.load %arg5[%c0_5, %c0_6] : memref<6x256xf32, #tpu.memory_space<vmem>>, vector<6x256xf32>
    tpu.vector_store %arg5[%c0_5, %c0_6], %6 {strides = array<i32>} : memref<6x256xf32, #tpu.memory_space<vmem>>, vector<6x256xf32>,
    return
  }
  func.func @transform_0(%arg0: i32, %arg1: i32) -> (i32, i32) {
    %c0_i32 = arith.constant 0 : i32
    %c0_i32_0 = arith.constant 0 : i32
    return %arg0, %c0_i32 : i32, i32
  }
  func.func @transform_1(%arg0: i32, %arg1: i32) -> (i32, i32) {
    %c0_i32 = arith.constant 0 : i32
    %c0_i32_0 = arith.constant 0 : i32
    return %arg0, %c0_i32 : i32, i32
  }
  func.func @transform_2(%arg0: i32, %arg1: i32) -> (i32, i32) {
    %c0_i32 = arith.constant 0 : i32
    return %arg0, %arg1 : i32, i32
  }
  func.func @transform_3(%arg0: i32, %arg1: i32) -> (i32, i32) {
    %c0_i32 = arith.constant 0 : i32
    return %arg0, %arg1 : i32, i32
  }
}

</mosaic_0001>

<llo_original>
// kernel: tpu_custom_call.1
$region0: #{tpu_custom_call.1}
  #allocation0 [shape = 'u32[]', space=smem, size = 0x4, offset = 0x4, fixed_abs, tag = 'smem constant byte address 0x4 - core index']
  #allocation1 [shape = 'u32[144,128]{1,0:T(1,128)}', space=vmem, size = 0x12000, scoped, tag = 'internal scratch']
  %s0 = inlined_call_operand.vmem [shape: f32[6,1], index: 0, kind: input, shape index: {}]
  %s1 = inlined_call_operand.vmem [shape: f32[6,1], index: 1, kind: input, shape index: {}]
  %s2 = inlined_call_operand.vmem [shape: f32[6,256], index: 2, kind: input, shape index: {}]
  %s3 = inlined_call_operand.hbm [shape: f32[6,256], index: 3, kind: output, shape index: {}]
  %s4 = sld [smem:[#allocation0]]
  $region22: #{tpu_custom_call.1} parent=0
    _
  %s6 = ssub.s32 1, %s4
  %s7 = scalar_select 0, %s6, %s4
  $region1: #{tpu_custom_call.1} parent=0
    #allocation2 [shape = 'u8[8192]{0}', space=vmem, size = 0x2000, scoped, tag = 'output window, operand 0, single buffered']
    #allocation3 [shape = 's32[1]{0}', space=sflag, size = 0x4, scoped, tag = 'scoped memory for tpu_custom_call.1']
    %8 = vsyncpa [#allocation3], 0
    // Predicated region
    $region2: #{tpu_custom_call.1} parent=1 // pred_check
      _
    $region3: #{tpu_custom_call.1} parent=1 // pred_check_branch
      %10 = sbr.rel (0) target = $region5
    $region4: #{tpu_custom_call.1} parent=1 // pred_region
      _
    $region5: #{tpu_custom_call.1} parent=1 // pred_fallthru
      _
    // Predicated region
    $region6: #{tpu_custom_call.1} parent=1 // pred_check
      _
    $region7: #{tpu_custom_call.1} parent=1 // pred_check_branch
      %12 = sbr.rel (0) target = $region9
    $region8: #{tpu_custom_call.1} parent=1 // pred_region
      _
    $region9: #{tpu_custom_call.1} parent=1 // pred_fallthru
      _
    // Predicated region
    $region10: #{tpu_custom_call.1} parent=1 // pred_check
      _
    $region11: #{tpu_custom_call.1} parent=1 // pred_check_branch
      %14 = sbr.rel (0) target = $region13
    $region12: #{tpu_custom_call.1} parent=1 // pred_region
      _
    $region13: #{tpu_custom_call.1} parent=1 // pred_fallthru
      _
    %v15 = vld [vmem:[%s2] sm:$0x3f]
    %v16 = vld [vmem:[%s2 + $0x8] sm:$0x3f]
    %v17 = vld [vmem:[%s0] sm:$0x3f]
    %19 = vset.pattern.permute.xlu0 0
    %20 = vperm.xlu0 %19, %v17
    %v21 = vpop.permute.xlu0 %20
    %v23 = vmul.f32 %v15, %v21
    %v24 = vmul.f32 %v16, %v21
    %v25 = vld [vmem:[%s1] sm:$0x3f]
    %27 = vset.pattern.permute.xlu0 0
    %28 = vperm.xlu0 %27, %v25
    %v29 = vpop.permute.xlu0 %28
    %v31 = vadd.f32 %v23, %v29
    %v32 = vadd.f32 %v24, %v29
    %33 = vst [vmem:[#allocation2] sm:$0x3f] %v31
    %34 = vst [vmem:[#allocation2 + $0x8] sm:$0x3f] %v32
    // Predicated region
    $region14: #{tpu_custom_call.1} parent=1 // pred_check
      _
    $region15: #{tpu_custom_call.1} parent=1 // pred_check_branch
      %36 = sbr.rel (0) target = $region17
    $region16: #{tpu_custom_call.1} parent=1 // pred_region
      %s38 = ssub.s32 256, 256
      %39 = vsyncadd [#allocation3], %s38
      %s41 = sshll.u32 [#allocation2], 4
      %s42 = int_to_ptr.vmem [resolvable:$true] %s41
      %44 = dma.vmem_to_hbm [thread:$0]  %s42, 256, %s3, [#allocation3]
    $region17: #{tpu_custom_call.1} parent=1 // pred_fallthru
      _
    // Predicated region
    $region18: #{tpu_custom_call.1} parent=1 // pred_check
      _
    $region19: #{tpu_custom_call.1} parent=1 // pred_check_branch
      %46 = sbr.rel (0) target = $region21
    $region20: #{tpu_custom_call.1} parent=1 // pred_region
      %47 = dma.done [#allocation3], 256
    $region21: #{tpu_custom_call.1} parent=1 // pred_fallthru
      _
    %48 = vsyncpa [#allocation3], 1

</llo_original>
